<compile_context>
chip_gen: v6e
topology: v6e:2x2x1
jax: 0.10.0
libtpu: 0.0.40
codegen_flags: <defaults>
</compile_context>

<pallas_src>
import functools

import numpy as np
import jax
import jax.numpy as jnp
from jax.experimental import pallas as pl
from jax.experimental.pallas import tpu as pltpu

LANES = 128


def _cdiv(a, b):
    return -(-a // b)


def _round_up(a, b):
    return _cdiv(a, b) * b


def _build_weight_matrices(C):
    """128x128 gate->weight mixing matrices for the lane-packed [rows, 128] layout.

    Each 128-lane row packs 128//C cells of C channels.  For each cell group the
    objectness gates live on channels 4 and 9; Mp mixes the (t>0) gates and Mz
    mixes the (t==0) gates into the per-channel loss weights:
      ch 0..3  : 5 * obj1          ch 5..8 : 5 * obj2
      ch 4     : obj1 + 0.5*nobj1  ch 9    : obj2 + 0.5*nobj2
      ch 10..  : obj1 + obj2
    """
    groups = LANES // C
    Mp = np.zeros((LANES, LANES), np.float32)   # applied to (t > 0) gates
    Mz = np.zeros((LANES, LANES), np.float32)   # applied to (t == 0) gates
    for g in range(groups):
        base = g * C
        for obj_c, coord_lo in ((4, 0), (9, 5)):
            src = base + obj_c
            Mp[src, base + coord_lo: base + coord_lo + 4] = 5.0   # x, y, w, h
            Mp[src, base + obj_c] = 1.0                            # objectness
            Mp[src, base + 10: base + C] = 1.0                     # class probs
            Mz[src, base + obj_c] = 0.5                            # no-object
    return Mp, Mz


def _yolo_loss_kernel(o_ref, t_ref, mp_ref, mz_ref, out_ref, *,
                      tile_rows, total_rows, C):
    """One tile of the fused weighted-MSE partial sum.

    o_ref, t_ref : (tile_rows, 128) VMEM tiles (8 cells of 16 channels per row).
    mp_ref, mz_ref : (128, 128) bf16 constant mixing matrices (resident in VMEM).
    out_ref      : (1, 8, 128) lane-dense per-tile partial-sum slab.
    """
    o = o_ref[...].astype(jnp.float32)          # (tile_rows, 128)
    t = t_ref[...].astype(jnp.float32)

    if total_rows % tile_rows:
        # Last tile sticks past the packed array: zero the stale rows so they
        # contribute exactly 0 (zero targets/outputs -> weight * err == 0).
        rows_left = total_rows - pl.program_id(0) * tile_rows
        row_id = jax.lax.broadcasted_iota(jnp.int32, (tile_rows, LANES), 0)
        valid = row_id < rows_left
        o = jnp.where(valid, o, 0.0)
        t = jnp.where(valid, t, 0.0)

    # Channel index of every lane (each 128-lane row packs 128//C cells).
    chan = jax.lax.broadcasted_iota(jnp.int32, (1, LANES), 1) % C
    size_mask = (chan == 2) | (chan == 3) | (chan == 7) | (chan == 8)

    # Error: plain squared diff everywhere except the 4 size channels, where
    # (sqrt t - sqrt o)^2 == t + o - 2*sqrt(t*o)  -> a single EUP sqrt pass.
    d = t - o
    err = jnp.where(size_mask, t + o - 2.0 * jnp.sqrt(t * o), d * d)

    # Per-element weights on the otherwise-idle MXU: 0/1 gates mixed through
    # constant matrices (values {5, 1, 0.5} -> exact in bf16 with f32 accum).
    gp = (t > 0.0).astype(jnp.bfloat16)
    gz = (t == 0.0).astype(jnp.bfloat16)
    w = (jnp.dot(gp, mp_ref[...], preferred_element_type=jnp.float32)
         + jnp.dot(gz, mz_ref[...], preferred_element_type=jnp.float32))

    # Zero-weight lanes must contribute exactly 0 (mirrors the reference's
    # boolean indexing; also keeps sqrt-NaNs of non-object cells out of the sum).
    contrib = jnp.where(w > 0.0, w * err, 0.0)

    # VALU-only partial reduction onto a lane/sublane-aligned (8,128) slab;
    # the tiny cross-lane finish runs in XLA on the per-tile partials.
    psum = jnp.sum(contrib.reshape(tile_rows // 8, 8, LANES), axis=0)
    out_ref[...] = psum[None, :, :]


def custom_loss_pallas(outputs, targets, *, tile_rows=2048):
    """outputs, targets: [B, S, S, C] arrays (f32 or bf16). Returns scalar f32 loss."""
    assert outputs.shape == targets.shape, "outputs/targets shape mismatch"
    B, S1, S2, C = targets.shape
    # TODO(synk): packing requires C | 128 (e.g. C=16); other channel counts
    # would need a different cell-per-row packing.
    assert C >= 11 and LANES % C == 0, "channel count must be >= 11 and divide 128"
    cells_per_row = LANES // C
    N = B * S1 * S2

    o2 = outputs.reshape(N, C)
    t2 = targets.reshape(N, C)

    # Sublane granule of the packed dtype (8 rows for 4-byte, 16 for 2-byte).
    sub = max(8, 32 // np.dtype(targets.dtype).itemsize)
    cell_align = sub * cells_per_row            # packed-row count multiple of `sub`
    n_cells = _round_up(N, cell_align)
    if n_cells != N:
        # Tiny alignment pad only (< cell_align cells); zero cells contribute 0.
        # Tile-granularity padding is avoided: the last tile is row-masked in-kernel.
        pad = n_cells - N
        o2 = jnp.pad(o2, ((0, pad), (0, 0)))
        t2 = jnp.pad(t2, ((0, pad), (0, 0)))

    R = (n_cells * C) // LANES                  # packed rows, multiple of `sub`
    o_packed = o2.reshape(R, LANES)
    t_packed = t2.reshape(R, LANES)

    tile_rows = max(sub, (int(tile_rows) // sub) * sub)
    tile_rows = min(tile_rows, R)
    num_tiles = _cdiv(R, tile_rows)

    mp_np, mz_np = _build_weight_matrices(C)
    mp = jnp.asarray(mp_np, dtype=jnp.bfloat16)
    mz = jnp.asarray(mz_np, dtype=jnp.bfloat16)

    kernel = functools.partial(_yolo_loss_kernel,
                               tile_rows=tile_rows, total_rows=R, C=C)

    partials = pl.pallas_call(
        kernel,
        out_shape=jax.ShapeDtypeStruct((num_tiles, 8, LANES), jnp.float32),
        grid=(num_tiles,),
        in_specs=[
            pl.BlockSpec((tile_rows, LANES), lambda i: (i, 0)),
            pl.BlockSpec((tile_rows, LANES), lambda i: (i, 0)),
            pl.BlockSpec((LANES, LANES), lambda i: (0, 0)),   # constant block: no re-DMA
            pl.BlockSpec((LANES, LANES), lambda i: (0, 0)),
        ],
        out_specs=pl.BlockSpec((1, 8, LANES), lambda i: (i, 0, 0)),
        compiler_params=pltpu.CompilerParams(
            dimension_semantics=("parallel",),
            vmem_limit_bytes=32 * 1024 * 1024,
        ),
    )(o_packed, t_packed, mp, mz)

    # Tiny epilogue in XLA: sum per-tile partial slabs and divide by batch size.
    return jnp.sum(partials) / jnp.float32(B)


def custom_loss_ref(outputs, targets):
    """Pure-JAX reference mirroring the PyTorch boolean-masking formulation."""
    t = targets.astype(jnp.float32)
    o = outputs.astype(jnp.float32)
    obj1 = t[..., 4:5] > 0
    obj2 = t[..., 9:10] > 0
    nobj1 = t[..., 4:5] == 0
    nobj2 = t[..., 9:10] == 0

    def msum(mask, x):
        return jnp.sum(jnp.where(mask, x, 0.0))

    coords = 5.0 * (
        msum(obj1, (t[..., 0:2] - o[..., 0:2]) ** 2) +
        msum(obj1, (jnp.sqrt(t[..., 2:4]) - jnp.sqrt(o[..., 2:4])) ** 2) +
        msum(obj2, (t[..., 5:7] - o[..., 5:7]) ** 2) +
        msum(obj2, (jnp.sqrt(t[..., 7:9]) - jnp.sqrt(o[..., 7:9])) ** 2))
    cls = (msum(obj1, (t[..., 4:5] - o[..., 4:5]) ** 2) +
           msum(obj2, (t[..., 9:10] - o[..., 9:10]) ** 2) +
           0.5 * (msum(nobj1, (t[..., 4:5] - o[..., 4:5]) ** 2) +
                  msum(nobj2, (t[..., 9:10] - o[..., 9:10]) ** 2)))
    dpred = (msum(obj1, (t[..., 10:] - o[..., 10:]) ** 2) +
             msum(obj2, (t[..., 10:] - o[..., 10:]) ** 2))
    return (coords + cls + dpred) / targets.shape[0]


if __name__ == "__main__":
    def make_inputs(key, B, S, C):
        k_o, k_t, k_m1, k_m2 = jax.random.split(key, 4)
        # nonnegative values so sqrt of the size channels is well defined
        out = jax.random.uniform(k_o, (B, S, S, C), jnp.float32, 0.01, 1.0)
        tgt = jax.random.uniform(k_t, (B, S, S, C), jnp.float32, 0.01, 1.0)
        m1 = (jax.random.uniform(k_m1, (B, S, S)) > 0.5).astype(jnp.float32)
        m2 = (jax.random.uniform(k_m2, (B, S, S)) > 0.5).astype(jnp.float32)
        tgt = tgt.at[..., 4].set(m1)
        tgt = tgt.at[..., 9].set(m2)
        return out, tgt

    key = jax.random.PRNGKey(0)
    k1, k2 = jax.random.split(key)

    # Primary: B=2, S=8, C=16 -> 128 cells -> 16 packed rows of 128 lanes.
    o1, t1 = make_inputs(k1, 2, 8, 16)
    ref1 = custom_loss_ref(o1, t1)
    for tr in (2048, 8, 16):            # single-tile and multi-tile paths
        loss = custom_loss_pallas(o1, t1, tile_rows=tr)
        jax.block_until_ready(loss)
        assert jnp.allclose(loss, ref1, rtol=1e-4, atol=1e-3), (tr, loss, ref1)

    # Odd shape: B=3, S=7 -> 147 cells (exercises alignment pad + tail row mask).
    o2, t2 = make_inputs(k2, 3, 7, 16)
    ref2 = custom_loss_ref(o2, t2)
    for tr in (16, 2048):
        loss = custom_loss_pallas(o2, t2, tile_rows=tr)
        jax.block_until_ready(loss)
        assert jnp.allclose(loss, ref2, rtol=1e-4, atol=1e-3), (tr, loss, ref2)

    print("KERNEL_OK")
</pallas_src>

<mosaic_0001>
module attributes {stable_mosaic.version = 11 : i64} {
  func.func @_yolo_loss_kernel(%arg0: i32, %arg1: memref<16x128xf32, #tpu.memory_space<vmem>>, %arg2: memref<16x128xf32, #tpu.memory_space<vmem>>, %arg3: memref<128x128xbf16, #tpu.memory_space<vmem>>, %arg4: memref<128x128xbf16, #tpu.memory_space<vmem>>, %arg5: memref<1x8x128xf32, #tpu.memory_space<vmem>>) attributes {dimension_semantics = [#tpu.dimension_semantics<parallel>], iteration_bounds = array<i64: 1>, scalar_prefetch = 0 : i64, scratch_operands = 0 : i64, tpu.core_type = #tpu.core_type<tc>, window_params = [{transform_indices = @transform_0, window_bounds = array<i64: 16, 128>}, {transform_indices = @transform_1, window_bounds = array<i64: 16, 128>}, {pipeline_mode = #tpu.pipeline_mode<synchronous>, transform_indices = @transform_2, window_bounds = array<i64: 128, 128>}, {pipeline_mode = #tpu.pipeline_mode<synchronous>, transform_indices = @transform_3, window_bounds = array<i64: 128, 128>}, {transform_indices = @transform_4, window_bounds = array<i64: 1, 8, 128>}]} {
    %c0 = arith.constant 0 : index
    %c0_0 = arith.constant 0 : index
    %0 = vector.load %arg1[%c0, %c0_0] : memref<16x128xf32, #tpu.memory_space<vmem>>, vector<16x128xf32>
    %c0_1 = arith.constant 0 : index
    %c0_2 = arith.constant 0 : index
    %1 = vector.load %arg2[%c0_1, %c0_2] : memref<16x128xf32, #tpu.memory_space<vmem>>, vector<16x128xf32>
    %2 = tpu.iota {dimensions = array<i32: 1>} : vector<1x128xi32>
    %c16_i32 = arith.constant 16 : i32
    %c0_i32 = arith.constant 0 : i32
    %3 = arith.cmpi eq, %c16_i32, %c0_i32 : i32
    %c1_i32 = arith.constant 1 : i32
    %4 = arith.select %3, %c1_i32, %c16_i32 : i32
    %5 = vector.broadcast %4 : i32 to vector<1x128xi32>
    %6 = arith.remsi %2, %5 : vector<1x128xi32>
    %c0_i32_3 = arith.constant 0 : i32
    %7 = vector.broadcast %c0_i32_3 : i32 to vector<1x128xi32>
    %8 = arith.cmpi ne, %6, %7 : vector<1x128xi32>
    %c0_i32_4 = arith.constant 0 : i32
    %9 = vector.broadcast %c0_i32_4 : i32 to vector<1x128xi32>
    %10 = arith.cmpi slt, %6, %9 : vector<1x128xi32>
    %c0_i32_5 = arith.constant 0 : i32
    %11 = arith.cmpi slt, %4, %c0_i32_5 : i32
    %12 = vector.broadcast %11 : i1 to vector<1x128xi1>
    %13 = vector.broadcast %12 : vector<1x128xi1> to vector<1x128xi1>
    %14 = arith.xori %10, %13 : vector<1x128xi1>
    %15 = arith.andi %14, %8 : vector<1x128xi1>
    %16 = vector.broadcast %4 : i32 to vector<1x128xi32>
    %17 = arith.addi %6, %16 : vector<1x128xi32>
    %18 = arith.select %15, %17, %6 : vector<1x128xi1>, vector<1x128xi32>
    %c2_i32 = arith.constant 2 : i32
    %19 = vector.broadcast %c2_i32 : i32 to vector<1x128xi32>
    %20 = arith.cmpi eq, %18, %19 : vector<1x128xi32>
    %c3_i32 = arith.constant 3 : i32
    %21 = vector.broadcast %c3_i32 : i32 to vector<1x128xi32>
    %22 = arith.cmpi eq, %18, %21 : vector<1x128xi32>
    %23 = arith.ori %20, %22 : vector<1x128xi1>
    %c7_i32 = arith.constant 7 : i32
    %24 = vector.broadcast %c7_i32 : i32 to vector<1x128xi32>
    %25 = arith.cmpi eq, %18, %24 : vector<1x128xi32>
    %26 = arith.ori %23, %25 : vector<1x128xi1>
    %c8_i32 = arith.constant 8 : i32
    %27 = vector.broadcast %c8_i32 : i32 to vector<1x128xi32>
    %28 = arith.cmpi eq, %18, %27 : vector<1x128xi32>
    %29 = arith.ori %26, %28 : vector<1x128xi1>
    %30 = arith.subf %1, %0 : vector<16x128xf32>
    %31 = arith.addf %1, %0 : vector<16x128xf32>
    %32 = arith.mulf %1, %0 : vector<16x128xf32>
    %33 = math.sqrt %32 : vector<16x128xf32>
    %cst = arith.constant 2.000000e+00 : f32
    %34 = vector.broadcast %cst : f32 to vector<16x128xf32>
    %35 = arith.mulf %34, %33 : vector<16x128xf32>
    %36 = arith.subf %31, %35 : vector<16x128xf32>
    %37 = arith.mulf %30, %30 : vector<16x128xf32>
    %38 = vector.shape_cast %29 : vector<1x128xi1> to vector<1x128xi1>
    %39 = vector.broadcast %38 : vector<1x128xi1> to vector<16x128xi1>
    %40 = arith.select %39, %36, %37 : vector<16x128xi1>, vector<16x128xf32>
    %cst_6 = arith.constant 0.000000e+00 : f32
    %41 = vector.broadcast %cst_6 : f32 to vector<16x128xf32>
    %42 = arith.cmpf ogt, %1, %41 : vector<16x128xf32>
    %43 = arith.extui %42 : vector<16x128xi1> to vector<16x128xi32>
    %44 = arith.sitofp %43 : vector<16x128xi32> to vector<16x128xf32>
    %45 = arith.truncf %44 : vector<16x128xf32> to vector<16x128xbf16>
    %cst_7 = arith.constant 0.000000e+00 : f32
    %46 = vector.broadcast %cst_7 : f32 to vector<16x128xf32>
    %47 = arith.cmpf oeq, %1, %46 : vector<16x128xf32>
    %48 = arith.extui %47 : vector<16x128xi1> to vector<16x128xi32>
    %49 = arith.sitofp %48 : vector<16x128xi32> to vector<16x128xf32>
    %50 = arith.truncf %49 : vector<16x128xf32> to vector<16x128xbf16>
    %c0_8 = arith.constant 0 : index
    %c0_9 = arith.constant 0 : index
    %51 = vector.load %arg3[%c0_8, %c0_9] : memref<128x128xbf16, #tpu.memory_space<vmem>>, vector<128x128xbf16>
    %cst_10 = arith.constant dense<0.000000e+00> : vector<16x128xf32>
    %52 = tpu.matmul %45, %51, %cst_10 {dimension_numbers = #tpu.dot_dimension_numbers<[1], [0], [0], [1], [0, 0, 1, 1], [], []>} : vector<16x128xbf16>, vector<128x128xbf16>, vector<16x128xf32> -> vector<16x128xf32>
    %c0_11 = arith.constant 0 : index
    %c0_12 = arith.constant 0 : index
    %53 = vector.load %arg4[%c0_11, %c0_12] : memref<128x128xbf16, #tpu.memory_space<vmem>>, vector<128x128xbf16>
    %cst_13 = arith.constant dense<0.000000e+00> : vector<16x128xf32>
    %54 = tpu.matmul %50, %53, %cst_13 {dimension_numbers = #tpu.dot_dimension_numbers<[1], [0], [0], [1], [0, 0, 1, 1], [], []>} : vector<16x128xbf16>, vector<128x128xbf16>, vector<16x128xf32> -> vector<16x128xf32>
    %55 = arith.addf %52, %54 : vector<16x128xf32>
    %cst_14 = arith.constant 0.000000e+00 : f32
    %56 = vector.broadcast %cst_14 : f32 to vector<16x128xf32>
    %57 = arith.cmpf ogt, %55, %56 : vector<16x128xf32>
    %58 = arith.mulf %55, %40 : vector<16x128xf32>
    %cst_15 = arith.constant 0.000000e+00 : f32
    %59 = vector.broadcast %cst_15 : f32 to vector<16x128xf32>
    %60 = arith.select %57, %58, %59 : vector<16x128xi1>, vector<16x128xf32>
    %61 = vector.shape_cast %60 : vector<16x128xf32> to vector<2x8x128xf32>
    %cst_16 = arith.constant dense<0.000000e+00> : vector<8x128xf32>
    %62 = vector.multi_reduction <add>, %61, %cst_16 [0] : vector<2x8x128xf32> to vector<8x128xf32>
    %63 = vector.shape_cast %62 : vector<8x128xf32> to vector<1x8x128xf32>
    %c0_17 = arith.constant 0 : index
    %c0_18 = arith.constant 0 : index
    %c0_19 = arith.constant 0 : index
    %64 = vector.load %arg5[%c0_17, %c0_18, %c0_19] : memref<1x8x128xf32, #tpu.memory_space<vmem>>, vector<1x8x128xf32>
    tpu.vector_store %arg5[%c0_17, %c0_18, %c0_19], %63 {strides = array<i32>} : memref<1x8x128xf32, #tpu.memory_space<vmem>>, vector<1x8x128xf32>,
    return
  }
  func.func @transform_0(%arg0: i32) -> (i32, i32) {
    %c0_i32 = arith.constant 0 : i32
    %c0_i32_0 = arith.constant 0 : i32
    return %arg0, %c0_i32 : i32, i32
  }
  func.func @transform_1(%arg0: i32) -> (i32, i32) {
    %c0_i32 = arith.constant 0 : i32
    %c0_i32_0 = arith.constant 0 : i32
    return %arg0, %c0_i32 : i32, i32
  }
  func.func @transform_2(%arg0: i32) -> (i32, i32) {
    %c0_i32 = arith.constant 0 : i32
    %c0_i32_0 = arith.constant 0 : i32
    %c0_i32_1 = arith.constant 0 : i32
    return %c0_i32, %c0_i32_0 : i32, i32
  }
  func.func @transform_3(%arg0: i32) -> (i32, i32) {
    %c0_i32 = arith.constant 0 : i32
    %c0_i32_0 = arith.constant 0 : i32
    %c0_i32_1 = arith.constant 0 : i32
    return %c0_i32, %c0_i32_0 : i32, i32
  }
  func.func @transform_4(%arg0: i32) -> (i32, i32, i32) {
    %c0_i32 = arith.constant 0 : i32
    %c0_i32_0 = arith.constant 0 : i32
    %c0_i32_1 = arith.constant 0 : i32
    return %arg0, %c0_i32, %c0_i32_0 : i32, i32, i32
  }
}

</mosaic_0001>

<llo_original>
// kernel: tpu_custom_call.1
$region0: #{tpu_custom_call.1}
  #allocation0 [shape = 'u32[]', space=smem, size = 0x4, offset = 0x4, fixed_abs, tag = 'smem constant byte address 0x4 - core index']
  #allocation1 [shape = 'u32[144,128]{1,0:T(1,128)}', space=vmem, size = 0x12000, scoped, tag = 'internal scratch']
  %s0 = inlined_call_operand.hbm [shape: f32[16,128], index: 0, kind: input, shape index: {}]
  %s1 = inlined_call_operand.hbm [shape: f32[16,128], index: 1, kind: input, shape index: {}]
  %s2 = inlined_call_operand.hbm [shape: bf16[128,128], index: 2, kind: input, shape index: {}]
  %s3 = inlined_call_operand.hbm [shape: bf16[128,128], index: 3, kind: input, shape index: {}]
  %s4 = inlined_call_operand.hbm [shape: f32[1,8,128], index: 4, kind: output, shape index: {}]
  %s5 = sld [smem:[#allocation0]]
  $region42: #{tpu_custom_call.1} parent=0
    _
  %s7 = ssub.s32 1, %s5
  %s8 = scalar_select 0, %s7, %s5
  $region1: #{tpu_custom_call.1} parent=0
    #allocation2 [shape = 'u8[8192]{0}', space=vmem, size = 0x2000, scoped, tag = 'input window, operand 0, single buffered']
    #allocation3 [shape = 's32[1]{0}', space=sflag, size = 0x4, scoped, tag = 'scoped memory for tpu_custom_call.1']
    #allocation4 [shape = 's32[1]{0}', space=sflag, size = 0x4, scoped, tag = 'scoped memory for tpu_custom_call.1']
    #allocation5 [shape = 'u8[8192]{0}', space=vmem, size = 0x2000, scoped, tag = 'input window, operand 1, single buffered']
    #allocation6 [shape = 's32[1]{0}', space=sflag, size = 0x4, scoped, tag = 'scoped memory for tpu_custom_call.1']
    #allocation7 [shape = 'u8[32768]{0}', space=vmem, size = 0x8000, scoped, tag = 'input window, operand 2, single buffered']
    #allocation8 [shape = 'u8[32768]{0}', space=vmem, size = 0x8000, scoped, tag = 'input window, operand 3, single buffered']
    #allocation9 [shape = 's32[1]{0}', space=sflag, size = 0x4, scoped, tag = 'scoped memory for tpu_custom_call.1']
    #allocation10 [shape = 'u8[4096]{0}', space=vmem, size = 0x1000, scoped, tag = 'output window, operand 0, single buffered']
    %9 = vsyncpa [#allocation3], 0
    %10 = vsyncpa [#allocation6], 0
    %11 = vsyncpa [#allocation9], 0
    %12 = vsyncpa [#allocation4], 0
    // Predicated region
    $region2: #{tpu_custom_call.1} parent=1 // pred_check
      _
    $region3: #{tpu_custom_call.1} parent=1 // pred_check_branch
      %14 = sbr.rel (0) target = $region5
    $region4: #{tpu_custom_call.1} parent=1 // pred_region
      %s16 = ssub.s32 256, 256
      %17 = vsyncadd [#allocation3], %s16
      %s18 = sshll.u32 [#allocation2], 4
      %s19 = int_to_ptr.vmem [resolvable:$true] %s18
      %24 = dma.hbm_to_vmem [thread:$0]  %s0, 256, %s19, [#allocation3], 128, 128, 8
    $region5: #{tpu_custom_call.1} parent=1 // pred_fallthru
      _
    // Predicated region
    $region6: #{tpu_custom_call.1} parent=1 // pred_check
      _
    $region7: #{tpu_custom_call.1} parent=1 // pred_check_branch
      %26 = sbr.rel (0) target = $region9
    $region8: #{tpu_custom_call.1} parent=1 // pred_region
      %s28 = ssub.s32 256, 256
      %29 = vsyncadd [#allocation6], %s28
      %s30 = sshll.u32 [#allocation5], 4
      %s31 = int_to_ptr.vmem [resolvable:$true] %s30
      %36 = dma.hbm_to_vmem [thread:$0]  %s1, 256, %s31, [#allocation6], 128, 128, 8
    $region9: #{tpu_custom_call.1} parent=1 // pred_fallthru
      _
    // Predicated region
    $region10: #{tpu_custom_call.1} parent=1 // pred_check
      _
    $region11: #{tpu_custom_call.1} parent=1 // pred_check_branch
      %38 = sbr.rel (0) target = $region13
    $region12: #{tpu_custom_call.1} parent=1 // pred_region
      %s40 = ssub.s32 1024, 1024
      %41 = vsyncadd [#allocation6], %s40
      %s42 = sshll.u32 [#allocation7], 4
      %s43 = int_to_ptr.vmem [resolvable:$true] %s42
      %48 = dma.hbm_to_vmem [thread:$0]  %s2, 1024, %s43, [#allocation6], 64, 64, 4
    $region13: #{tpu_custom_call.1} parent=1 // pred_fallthru
      _
    // Predicated region
    $region14: #{tpu_custom_call.1} parent=1 // pred_check
      _
    $region15: #{tpu_custom_call.1} parent=1 // pred_check_branch
      %50 = sbr.rel (0) target = $region17
    $region16: #{tpu_custom_call.1} parent=1 // pred_region
      %s52 = ssub.s32 1024, 1024
      %53 = vsyncadd [#allocation9], %s52
      %s54 = sshll.u32 [#allocation8], 4
      %s55 = int_to_ptr.vmem [resolvable:$true] %s54
      %60 = dma.hbm_to_vmem [thread:$0]  %s3, 1024, %s55, [#allocation9], 64, 64, 4
    $region17: #{tpu_custom_call.1} parent=1 // pred_fallthru
      _
    // Predicated region
    $region18: #{tpu_custom_call.1} parent=1 // pred_check
      _
    $region19: #{tpu_custom_call.1} parent=1 // pred_check_branch
      %62 = sbr.rel (0) target = $region21
    $region20: #{tpu_custom_call.1} parent=1 // pred_region
      %63 = dma.done [#allocation3], 256
    $region21: #{tpu_custom_call.1} parent=1 // pred_fallthru
      _
    // Predicated region
    $region22: #{tpu_custom_call.1} parent=1 // pred_check
      _
    $region23: #{tpu_custom_call.1} parent=1 // pred_check_branch
      %65 = sbr.rel (0) target = $region25
    $region24: #{tpu_custom_call.1} parent=1 // pred_region
      %66 = dma.done [#allocation6], 256
    $region25: #{tpu_custom_call.1} parent=1 // pred_fallthru
      _
    // Predicated region
    $region26: #{tpu_custom_call.1} parent=1 // pred_check
      _
    $region27: #{tpu_custom_call.1} parent=1 // pred_check_branch
      %68 = sbr.rel (0) target = $region29
    $region28: #{tpu_custom_call.1} parent=1 // pred_region
      %69 = dma.done [#allocation6], 1024
    $region29: #{tpu_custom_call.1} parent=1 // pred_fallthru
      _
    // Predicated region
    $region30: #{tpu_custom_call.1} parent=1 // pred_check
      _
    $region31: #{tpu_custom_call.1} parent=1 // pred_check_branch
      %71 = sbr.rel (0) target = $region33
    $region32: #{tpu_custom_call.1} parent=1 // pred_region
      %72 = dma.done [#allocation9], 1024
    $region33: #{tpu_custom_call.1} parent=1 // pred_fallthru
      _
    %v74 = vld [vmem:[#allocation2] sm:$0xff]
    %v75 = vld [vmem:[#allocation2 + $0x8] sm:$0xff]
    %v76 = vld [vmem:[#allocation5] sm:$0xff]
    %v77 = vld [vmem:[#allocation5 + $0x8] sm:$0xff]
    %v78 = vlaneseq
    %v79 = vand.u32 %v78, 127
    %vm80 = vcmp.lt.s32.totalorder %v79, 0
    %v81 = vsub.s32 0, %v79
    %v82 = vsel %vm80, %v81, %v79
    %v83 = vshrl.u32 %v82, 4
    %v84 = vand.u32 %v82, 15
    %v85 = vsub.s32 0, %v84
    %v86 = vsel %vm80, %v85, %v84
    %vm87 = vcmp.ne.s32.totalorder %v86, 0
    %vm88 = vcmp.lt.s32.totalorder %v86, 0
    %vm89 = vmand %vm88, %vm87
    %v90 = vadd.s32 %v86, 16
    %v91 = vsel %vm89, %v90, %v86
    %vm92 = vcmp.eq.s32.totalorder %v91, 2
    %vm93 = vcmp.eq.s32.totalorder %v91, 3
    %vm94 = vmor %vm92, %vm93
    %vm95 = vcmp.eq.s32.totalorder %v91, 7
    %vm96 = vmor %vm94, %vm95
    %vm97 = vcmp.eq.s32.totalorder %v91, 8
    %vm98 = vmor %vm96, %vm97
    %v99 = vsub.f32 %v76, %v74
    %v100 = vsub.f32 %v77, %v75
    %v101 = vadd.f32 %v76, %v74
    %v102 = vadd.f32 %v77, %v75
    %v103 = vmul.f32 %v76, %v74
    %v104 = vmul.f32 %v77, %v75
    %v105 = vrsqrt.pop %v103
    %v106 = vmul.f32 %v103, %v105
    %vm107 = vcmp.eq.f32.partialorder %v103, inf
    %v108 = vsel %vm107, %v103, %v106
    %vm109 = vcmp.eq.f32.partialorder %v103, 0.0
    %v110 = vand.u32 %v103, 2147483648
    %v111 = vsel %vm109, %v110, %v108
    %v112 = vrsqrt.pop %v104
    %v113 = vmul.f32 %v104, %v112
    %vm114 = vcmp.eq.f32.partialorder %v104, inf
    %v115 = vsel %vm114, %v104, %v113
    %vm116 = vcmp.eq.f32.partialorder %v104, 0.0
    %v117 = vand.u32 %v104, 2147483648
    %v118 = vsel %vm116, %v117, %v115
    %v119 = vmul.f32 %v111, 2.0
    %v120 = vmul.f32 %v118, 2.0
    %v121 = vsub.f32 %v101, %v119
    %v122 = vsub.f32 %v102, %v120
    %v123 = vmul.f32 %v99, %v99
    %v124 = vmul.f32 %v100, %v100
    %v125 = vsel %vm98, 1, 0
    %vm126 = vcmp.eq.s32.totalorder %v125, 1
    %v127 = vsel %vm126, %v121, %v123
    %v128 = vsel %vm126, %v122, %v124
    %vm129 = vcmp.gt.f32.partialorder %v76, 0.0
    %vm130 = vcmp.gt.f32.partialorder %v77, 0.0
    %v131 = vsel %vm129, 1, 0
    %v132 = vsel %vm130, 1, 0
    %v133 = vcvt.s32.f32 %v131
    %v134 = vcvt.s32.f32 %v132
    %v135 = vpack.c.bf16 %v134, %v133
    %vm136 = vcmp.eq.f32.partialorder %v76, 0.0
    %vm137 = vcmp.eq.f32.partialorder %v77, 0.0
    %v138 = vsel %vm136, 1, 0
    %v139 = vsel %vm137, 1, 0
    %v140 = vcvt.s32.f32 %v138
    %v141 = vcvt.s32.f32 %v139
    %v142 = vpack.c.bf16 %v141, %v140
    %v143 = vld [vmem:[#allocation7] sm:$0xf]
    %v144 = vld [vmem:[#allocation7 + $0x4] sm:$0xf]
    %v145 = vld [vmem:[#allocation7 + $0x8] sm:$0xf]
    %v146 = vld [vmem:[#allocation7 + $0xc] sm:$0xf]
    %v147 = vld [vmem:[#allocation7 + $0x10] sm:$0xf]
    %v148 = vld [vmem:[#allocation7 + $0x14] sm:$0xf]
    %v149 = vld [vmem:[#allocation7 + $0x18] sm:$0xf]
    %v150 = vld [vmem:[#allocation7 + $0x1c] sm:$0xf]
    %v151 = vld [vmem:[#allocation7 + $0x20] sm:$0xf]
    %v152 = vld [vmem:[#allocation7 + $0x24] sm:$0xf]
    %v153 = vld [vmem:[#allocation7 + $0x28] sm:$0xf]
    %v154 = vld [vmem:[#allocation7 + $0x2c] sm:$0xf]
    %v155 = vld [vmem:[#allocation7 + $0x30] sm:$0xf]
    %v156 = vld [vmem:[#allocation7 + $0x34] sm:$0xf]
    %v157 = vld [vmem:[#allocation7 + $0x38] sm:$0xf]
    %v158 = vld [vmem:[#allocation7 + $0x3c] sm:$0xf]
    %v159 = vld [vmem:[#allocation8] sm:$0xf]
    %v160 = vld [vmem:[#allocation8 + $0x4] sm:$0xf]
    %v161 = vld [vmem:[#allocation8 + $0x8] sm:$0xf]
    %v162 = vld [vmem:[#allocation8 + $0xc] sm:$0xf]
    %v163 = vld [vmem:[#allocation8 + $0x10] sm:$0xf]
    %v164 = vld [vmem:[#allocation8 + $0x14] sm:$0xf]
    %v165 = vld [vmem:[#allocation8 + $0x18] sm:$0xf]
    %v166 = vld [vmem:[#allocation8 + $0x1c] sm:$0xf]
    %v167 = vld [vmem:[#allocation8 + $0x20] sm:$0xf]
    %v168 = vld [vmem:[#allocation8 + $0x24] sm:$0xf]
    %v169 = vld [vmem:[#allocation8 + $0x28] sm:$0xf]
    %v170 = vld [vmem:[#allocation8 + $0x2c] sm:$0xf]
    %v171 = vld [vmem:[#allocation8 + $0x30] sm:$0xf]
    %v172 = vld [vmem:[#allocation8 + $0x34] sm:$0xf]
    %v173 = vld [vmem:[#allocation8 + $0x38] sm:$0xf]
    %v174 = vld [vmem:[#allocation8 + $0x3c] sm:$0xf]
    %v191 = vunpack.c.l.b16 %v159
    %v192 = vunpack.c.l.b16 %v160
    %v193 = vunpack.c.l.b16 %v161
    %v194 = vunpack.c.l.b16 %v162
    %v195 = vunpack.c.l.b16 %v163
    %v196 = vunpack.c.l.b16 %v164
    %v197 = vunpack.c.l.b16 %v165
    %v198 = vunpack.c.l.b16 %v166
    %v199 = vunpack.c.l.b16 %v167
    %v200 = vunpack.c.l.b16 %v168
    %v201 = vunpack.c.l.b16 %v169
    %v202 = vunpack.c.l.b16 %v170
    %v203 = vunpack.c.l.b16 %v171
    %v204 = vunpack.c.l.b16 %v172
    %v205 = vunpack.c.l.b16 %v173
    %v206 = vunpack.c.l.b16 %v174
    %v207 = vpack.c.b16 %v192, %v191
    %v208 = vpack.c.b16 %v194, %v193
    %v209 = vpack.c.b16 %v196, %v195
    %v210 = vpack.c.b16 %v198, %v197
    %v211 = vpack.c.b16 %v200, %v199
    %v212 = vpack.c.b16 %v202, %v201
    %v213 = vpack.c.b16 %v204, %v203
    %v214 = vpack.c.b16 %v206, %v205
    %223 = vmatprep.subr.bf16.mxu0 0
    %224 = vmatpush1.bf16.msra.mxu0 %v214
    %225 = vmatprep.subr.bf16.mxu0 0
    %226 = vmatpush1.bf16.msra.mxu0 %v213
    %227 = vmatprep.subr.bf16.mxu0 0
    %228 = vmatpush1.bf16.msra.mxu0 %v212
    %229 = vmatprep.subr.bf16.mxu0 0
    %230 = vmatpush1.bf16.msra.mxu0 %v211
    %231 = vmatprep.subr.bf16.mxu0 0
    %232 = vmatpush1.bf16.msra.mxu0 %v210
    %233 = vmatprep.subr.bf16.mxu0 0
    %234 = vmatpush1.bf16.msra.mxu0 %v209
    %235 = vmatprep.subr.bf16.mxu0 0
    %236 = vmatpush1.bf16.msra.mxu0 %v208
    %237 = vmatprep.subr.bf16.mxu0 0
    %238 = vmatpush1.bf16.msra.mxu0 %v207
    %239 = vmatprep.subr.bf16.mxu0 0
    %240 = vmatpush2.bf16.msra.mxu0 0
    %241 = vmatprep.subr.bf16.mxu0 0
    %242 = vmatpush2.bf16.msra.mxu0 0
    %243 = vmatprep.subr.bf16.mxu0 0
    %244 = vmatpush2.bf16.msra.mxu0 0
    %245 = vmatprep.subr.bf16.mxu0 0
    %246 = vmatpush2.bf16.msra.mxu0 0
    %247 = vmatprep.subr.bf16.mxu0 0
    %248 = vmatpush2.bf16.msra.mxu0 0
    %249 = vmatprep.subr.bf16.mxu0 0
    %250 = vmatpush2.bf16.msra.mxu0 0
    %251 = vmatprep.subr.bf16.mxu0 0
    %252 = vmatpush2.bf16.msra.mxu0 0
    %253 = vmatprep.subr.bf16.mxu0 0
    %254 = vmatpush2.bf16.msra.mxu0 0
    %255 = vmatprep.mubr.bf16.mxu0 0
    %256 = vmatmul.mubr.bf16.gmra.mxu0 %v142
    %v257 = vpop.f32.mrf.mxu0
    %v258 = vadd.f32 0.0, %v257
    %v259 = vpop.f32.mrf.mxu0
    %v260 = vpop.f32.mrf.mxu0
    %v261 = vadd.f32 0.0, %v260
    %v262 = vpop.f32.mrf.mxu0
    %263 = vdwg.mxu0
    %v280 = vunpack.c.l.b16 %v143
    %v281 = vunpack.c.l.b16 %v144
    %v282 = vunpack.c.l.b16 %v145
    %v283 = vunpack.c.l.b16 %v146
    %v284 = vunpack.c.l.b16 %v147
    %v285 = vunpack.c.l.b16 %v148
    %v286 = vunpack.c.l.b16 %v149
    %v287 = vunpack.c.l.b16 %v150
    %v288 = vunpack.c.l.b16 %v151
    %v289 = vunpack.c.l.b16 %v152
    %v290 = vunpack.c.l.b16 %v153
    %v291 = vunpack.c.l.b16 %v154
    %v292 = vunpack.c.l.b16 %v155
    %v293 = vunpack.c.l.b16 %v156
    %v294 = vunpack.c.l.b16 %v157
    %v295 = vunpack.c.l.b16 %v158
    %v296 = vpack.c.b16 %v281, %v280
    %v297 = vpack.c.b16 %v283, %v282
    %v298 = vpack.c.b16 %v285, %v284
    %v299 = vpack.c.b16 %v287, %v286
    %v300 = vpack.c.b16 %v289, %v288
    %v301 = vpack.c.b16 %v291, %v290
    %v302 = vpack.c.b16 %v293, %v292
    %v303 = vpack.c.b16 %v295, %v294
    %312 = vmatprep.subr.bf16.mxu0 0
    %313 = vmatpush1.bf16.msra.mxu0 %v303
    %314 = vmatprep.subr.bf16.mxu0 0
    %315 = vmatpush1.bf16.msra.mxu0 %v302
    %316 = vmatprep.subr.bf16.mxu0 0
    %317 = vmatpush1.bf16.msra.mxu0 %v301
    %318 = vmatprep.subr.bf16.mxu0 0
    %319 = vmatpush1.bf16.msra.mxu0 %v300
    %320 = vmatprep.subr.bf16.mxu0 0
    %321 = vmatpush1.bf16.msra.mxu0 %v299
    %322 = vmatprep.subr.bf16.mxu0 0
    %323 = vmatpush1.bf16.msra.mxu0 %v298
    %324 = vmatprep.subr.bf16.mxu0 0
    %325 = vmatpush1.bf16.msra.mxu0 %v297
    %326 = vmatprep.subr.bf16.mxu0 0
    %327 = vmatpush1.bf16.msra.mxu0 %v296
    %328 = vmatprep.subr.bf16.mxu0 0
    %329 = vmatpush2.bf16.msra.mxu0 0
    %330 = vmatprep.subr.bf16.mxu0 0
    %331 = vmatpush2.bf16.msra.mxu0 0
    %332 = vmatprep.subr.bf16.mxu0 0
    %333 = vmatpush2.bf16.msra.mxu0 0
    %334 = vmatprep.subr.bf16.mxu0 0
    %335 = vmatpush2.bf16.msra.mxu0 0
    %336 = vmatprep.subr.bf16.mxu0 0
    %337 = vmatpush2.bf16.msra.mxu0 0
    %338 = vmatprep.subr.bf16.mxu0 0
    %339 = vmatpush2.bf16.msra.mxu0 0
    %340 = vmatprep.subr.bf16.mxu0 0
    %341 = vmatpush2.bf16.msra.mxu0 0
    %342 = vmatprep.subr.bf16.mxu0 0
    %343 = vmatpush2.bf16.msra.mxu0 0
    %344 = vmatprep.mubr.bf16.mxu0 0
    %345 = vmatmul.mubr.bf16.gmra.mxu0 %v135
    %v346 = vpop.f32.mrf.mxu0
    %v347 = vadd.f32 %v258, %v346
    %v348 = vpop.f32.mrf.mxu0
    %v349 = vpop.f32.mrf.mxu0
    %v350 = vadd.f32 %v261, %v349
    %v351 = vpop.f32.mrf.mxu0
    %352 = vdwg.mxu0
    %vm353 = vcmp.gt.f32.partialorder %v347, 0.0
    %vm354 = vcmp.gt.f32.partialorder %v350, 0.0
    %v355 = vmul.f32 %v347, %v127
    %v356 = vmul.f32 %v350, %v128
    %v357 = vsel %vm353, %v355, 0.0
    %v358 = vsel %vm354, %v356, 0.0
    %v359 = vadd.f32 %v357, %v358
    %360 = vst [vmem:[#allocation10] sm:$0xff] %v359
    // Predicated region
    $region34: #{tpu_custom_call.1} parent=1 // pred_check
      _
    $region35: #{tpu_custom_call.1} parent=1 // pred_check_branch
      %362 = sbr.rel (0) target = $region37
    $region36: #{tpu_custom_call.1} parent=1 // pred_region
      %s364 = ssub.s32 128, 128
      %365 = vsyncadd [#allocation4], %s364
      %s367 = sshll.u32 [#allocation10], 4
      %s368 = int_to_ptr.vmem [resolvable:$true] %s367
      %370 = dma.vmem_to_hbm [thread:$0]  %s368, 128, %s4, [#allocation4]
    $region37: #{tpu_custom_call.1} parent=1 // pred_fallthru
      _
    // Predicated region
    $region38: #{tpu_custom_call.1} parent=1 // pred_check
      _
    $region39: #{tpu_custom_call.1} parent=1 // pred_check_branch
      %372 = sbr.rel (0) target = $region41
    $region40: #{tpu_custom_call.1} parent=1 // pred_region
      %373 = dma.done [#allocation4], 128
    $region41: #{tpu_custom_call.1} parent=1 // pred_fallthru
      _
    %374 = vsyncpa [#allocation3], 1
    %375 = vsyncpa [#allocation6], 1
    %376 = vsyncpa [#allocation9], 1
    %377 = vsyncpa [#allocation4], 1

</llo_original>
